<compile_context>
chip_gen: v6e
topology: v6e:2x2x1
jax: 0.10.0
libtpu: 0.0.40
codegen_flags: <defaults>
</compile_context>

<pallas_src>
import math

import jax
import jax.numpy as jnp
from jax.experimental import pallas as pl
from jax.experimental.pallas import tpu as pltpu

# ---- model dims (small, consistent with the module) ----
B = 2               # batch
S = 8               # sequence length
E = 64              # hidden_size (embed_dim)
H = 4               # num_attention_heads
HD = E // H         # head_dim = 16
KV_DIM = HD         # multi_query -> kv_heads = 1
QKV_DIM = E + 2 * KV_DIM            # 96
OUT_W = 128                         # lane-dense padded width for all outputs
SCALE = 1.0 / math.sqrt(HD)         # scale_attn_weights=True, unscale=1
MASK_ADD = -1e30                    # additive mask (finite, safer than finfo.min)
MASK_VALUE = float(jnp.finfo(jnp.float32).min)   # reference only

ROWS = B * S                        # 16 flattened (batch, seq) rows
QROWS = ROWS * H                    # 64 flattened (head, batch, seq) rows (head-major)


def _attention_kernel(x_ref, w_attn_ref, b_attn_ref, w_proj_ref, b_proj_ref,
                      mask_ref, out_ref):
    # --- c_attn: one bf16 MXU matmul, fp32 accumulation, 128-lane output.
    x = x_ref[...].astype(jnp.bfloat16)                       # (ROWS, E)
    qkv = jnp.dot(x, w_attn_ref[...],
                  preferred_element_type=jnp.float32) + b_attn_ref[...]
    # qkv columns: [ q*scale (0:64) | k (64:80) | v (80:96) | zeros (96:128) ]
    q = qkv[:, :E]
    k = qkv[:, E:E + HD].astype(jnp.bfloat16)                  # (ROWS, HD)
    v = qkv[:, E + HD:E + 2 * HD].astype(jnp.bfloat16)         # (ROWS, HD)

    # --- per-head query split, head-major rows: qh[h*ROWS + r] = q[r, h*HD:(h+1)*HD].
    # Static lane-window slices + tile-aligned sublane concat: the single
    # unavoidable lane shuffle of multi-query attention; no round-trip reshapes.
    qh = jnp.concatenate([q[:, h * HD:(h + 1) * HD] for h in range(H)],
                         axis=0).astype(jnp.bfloat16)          # (QROWS, HD)

    # --- scores: one MXU push (all heads batched in rows), fp32 accumulate.
    scores = jax.lax.dot_general(qh, k, (((1,), (1,)), ((), ())),
                                 preferred_element_type=jnp.float32)
    scores = scores + mask_ref[...]                            # additive 0/-1e30 mask

    # --- open-coded fp32 softmax; divide goes to the EUP reciprocal.
    m = jnp.max(scores, axis=-1, keepdims=True)
    e = jnp.exp(scores - m)
    denom = jnp.sum(e, axis=-1, keepdims=True)
    p = (e * pl.reciprocal(denom, approx=True)).astype(jnp.bfloat16)

    # --- probs @ v: one MXU push.
    attn = jnp.dot(p, v, preferred_element_type=jnp.float32)   # (QROWS, HD)

    # --- c_proj with the head regroup folded in: free leading-dim split,
    #     head-batched matmul against (H, HD, 128) weights, sum over heads.
    attn3 = attn.reshape(H, ROWS, HD).astype(jnp.bfloat16)     # free split (head-major)
    yh = jnp.einsum('hqd,hde->hqe', attn3, w_proj_ref[...],
                    preferred_element_type=jnp.float32)        # (H, ROWS, 128)
    y = jnp.sum(yh, axis=0) + b_proj_ref[...]                  # (ROWS, 128); cols>=E are 0

    # --- lane-dense epilogue: [ y (0:64) | kv passthrough (64:96) | 0 (96:128) ]
    lane = jax.lax.broadcasted_iota(jnp.int32, (ROWS, OUT_W), 1)
    out_ref[...] = jnp.where(lane < E, y, qkv).astype(out_ref.dtype)


def prepare_params(w_attn, b_attn, w_proj, b_proj):
    """One-time (init) weight prep: fold 1/sqrt(head_dim) into q columns,
    pad output columns to 128 lanes, cast weights to bf16, split c_proj rows
    per head -> (H, HD, 128)."""
    col_scale = jnp.concatenate([jnp.full((E,), SCALE, jnp.float32),
                                 jnp.ones((2 * KV_DIM,), jnp.float32)])
    w_attn_s = w_attn * col_scale[None, :]
    b_attn_s = b_attn * col_scale[None, :]
    pad_a = OUT_W - QKV_DIM
    w_attn_p = jnp.pad(w_attn_s, ((0, 0), (0, pad_a))).astype(jnp.bfloat16)
    b_attn_p = jnp.pad(b_attn_s, ((0, 0), (0, pad_a))).astype(jnp.float32)
    pad_p = OUT_W - E
    w_proj3 = jnp.pad(w_proj, ((0, 0), (0, pad_p))).reshape(H, HD, OUT_W)
    w_proj3 = w_proj3.astype(jnp.bfloat16)
    b_proj_p = jnp.pad(b_proj, ((0, 0), (0, pad_p))).astype(jnp.float32)
    return w_attn_p, b_attn_p, w_proj3, b_proj_p


def build_additive_mask():
    """Precomputed additive mask (QROWS, ROWS), head-major rows: 0 where the
    key is same-batch and causal, -1e30 otherwise."""
    r = jnp.arange(ROWS)
    c = jnp.arange(ROWS)
    keep = ((r[:, None] // S) == (c[None, :] // S)) & \
           ((c[None, :] % S) <= (r[:, None] % S))
    mask2 = jnp.where(keep, 0.0, MASK_ADD).astype(jnp.float32)   # (ROWS, ROWS)
    return jnp.tile(mask2, (H, 1))                               # (QROWS, ROWS)


def gpt_bigcode_attention(hidden_states, w_attn_p, b_attn_p, w_proj3, b_proj_p,
                          mask_add):
    """hidden_states: (B, S, E) f32.  Remaining args come from prepare_params /
    build_additive_mask.  Returns (attn_output (B,S,E), present kv (B,S,2*HD))."""
    x2d = hidden_states.reshape(ROWS, E)

    slab = pl.pallas_call(
        _attention_kernel,
        out_shape=jax.ShapeDtypeStruct((ROWS, OUT_W), hidden_states.dtype),
        grid=(1,),
        in_specs=[
            pl.BlockSpec((ROWS, E), lambda i: (0, 0)),          # hidden_states
            pl.BlockSpec((E, OUT_W), lambda i: (0, 0)),         # c_attn weight (bf16, padded)
            pl.BlockSpec((1, OUT_W), lambda i: (0, 0)),         # c_attn bias (f32, padded)
            pl.BlockSpec((H, HD, OUT_W), lambda i: (0, 0, 0)),  # c_proj weight (bf16, per head)
            pl.BlockSpec((1, OUT_W), lambda i: (0, 0)),         # c_proj bias (f32, padded)
            pl.BlockSpec((QROWS, ROWS), lambda i: (0, 0)),      # additive mask
        ],
        out_specs=pl.BlockSpec((ROWS, OUT_W), lambda i: (0, 0)),
        compiler_params=pltpu.CompilerParams(
            dimension_semantics=("arbitrary",)),
    )(x2d, w_attn_p, b_attn_p, w_proj3, b_proj_p, mask_add)

    attn_output = slab[:, :E].reshape(B, S, E)
    present = slab[:, E:E + 2 * KV_DIM].reshape(B, S, 2 * KV_DIM)
    return attn_output, present


def reference_forward(x, w_attn, b_attn, w_proj, b_proj):
    """Pure-JAX fp32 replica of the PyTorch forward (multi_query, eval, causal)."""
    qkv = x @ w_attn + b_attn                          # (B, S, E+2*HD)
    q, kvp = qkv[..., :E], qkv[..., E:]
    k, v = kvp[..., :HD], kvp[..., HD:]
    qh = q.reshape(B, S, H, HD)
    scores = jnp.einsum("bqhd,bkd->bqhk", qh, k) * SCALE
    causal = jnp.tril(jnp.ones((S, S), dtype=bool))
    scores = jnp.where(causal[None, :, None, :], scores, MASK_VALUE)
    probs = jax.nn.softmax(scores, axis=-1)
    out = jnp.einsum("bqhk,bkd->bqhd", probs, v).reshape(B, S, E)
    y = out @ w_proj + b_proj
    return y, kvp


if __name__ == "__main__":
    key = jax.random.PRNGKey(0)
    k1, k2, k3, k4, k5 = jax.random.split(key, 5)

    hidden_states = jax.random.normal(k1, (B, S, E), dtype=jnp.float32)

    # nn.Linear parameters, stored pre-transposed as (in_features, out_features).
    w_attn = jax.random.normal(k2, (E, QKV_DIM), dtype=jnp.float32) * 0.05
    b_attn = jax.random.normal(k3, (1, QKV_DIM), dtype=jnp.float32) * 0.05
    w_proj = jax.random.normal(k4, (E, E), dtype=jnp.float32) * 0.05
    b_proj = jax.random.normal(k5, (1, E), dtype=jnp.float32) * 0.05

    # One-time init prep (scale fold, 128-lane padding, bf16 cast, per-head split).
    w_attn_p, b_attn_p, w_proj3, b_proj_p = prepare_params(
        w_attn, b_attn, w_proj, b_proj)
    mask_add = build_additive_mask()

    attn_out, present = gpt_bigcode_attention(
        hidden_states, w_attn_p, b_attn_p, w_proj3, b_proj_p, mask_add)
    jax.block_until_ready(attn_out)
    jax.block_until_ready(present)

    ref_out, ref_kv = reference_forward(
        hidden_states, w_attn, b_attn, w_proj, b_proj)
    # bf16 MXU operands (fp32 accumulation) -> compare vs fp32 reference at 2e-2.
    assert jnp.allclose(attn_out, ref_out, atol=2e-2, rtol=2e-2), \
        "attn_output mismatch"
    assert jnp.allclose(present, ref_kv, atol=2e-2, rtol=2e-2), \
        "present kv mismatch"

    print("KERNEL_OK")
</pallas_src>

<mosaic_0001>
module attributes {stable_mosaic.version = 11 : i64} {
  func.func @_attention_kernel(%arg0: i32, %arg1: memref<16x64xf32, #tpu.memory_space<vmem>>, %arg2: memref<64x128xbf16, #tpu.memory_space<vmem>>, %arg3: memref<1x128xf32, #tpu.memory_space<vmem>>, %arg4: memref<4x16x128xbf16, #tpu.memory_space<vmem>>, %arg5: memref<1x128xf32, #tpu.memory_space<vmem>>, %arg6: memref<64x16xf32, #tpu.memory_space<vmem>>, %arg7: memref<16x128xf32, #tpu.memory_space<vmem>>) attributes {dimension_semantics = [#tpu.dimension_semantics<arbitrary>], iteration_bounds = array<i64: 1>, scalar_prefetch = 0 : i64, scratch_operands = 0 : i64, tpu.core_type = #tpu.core_type<tc>, window_params = [{pipeline_mode = #tpu.pipeline_mode<synchronous>, transform_indices = @transform_0, window_bounds = array<i64: 16, 64>}, {pipeline_mode = #tpu.pipeline_mode<synchronous>, transform_indices = @transform_1, window_bounds = array<i64: 64, 128>}, {pipeline_mode = #tpu.pipeline_mode<synchronous>, transform_indices = @transform_2, window_bounds = array<i64: 1, 128>}, {pipeline_mode = #tpu.pipeline_mode<synchronous>, transform_indices = @transform_3, window_bounds = array<i64: 4, 16, 128>}, {pipeline_mode = #tpu.pipeline_mode<synchronous>, transform_indices = @transform_4, window_bounds = array<i64: 1, 128>}, {pipeline_mode = #tpu.pipeline_mode<synchronous>, transform_indices = @transform_5, window_bounds = array<i64: 64, 16>}, {pipeline_mode = #tpu.pipeline_mode<synchronous>, transform_indices = @transform_6, window_bounds = array<i64: 16, 128>}]} {
    %c0 = arith.constant 0 : index
    %c0_0 = arith.constant 0 : index
    %0 = vector.load %arg1[%c0, %c0_0] : memref<16x64xf32, #tpu.memory_space<vmem>>, vector<16x64xf32>
    %1 = arith.truncf %0 : vector<16x64xf32> to vector<16x64xbf16>
    %c0_1 = arith.constant 0 : index
    %c0_2 = arith.constant 0 : index
    %2 = vector.load %arg2[%c0_1, %c0_2] : memref<64x128xbf16, #tpu.memory_space<vmem>>, vector<64x128xbf16>
    %cst = arith.constant dense<0.000000e+00> : vector<16x128xf32>
    %3 = tpu.matmul %1, %2, %cst {dimension_numbers = #tpu.dot_dimension_numbers<[1], [0], [0], [1], [0, 0, 1, 1], [], []>} : vector<16x64xbf16>, vector<64x128xbf16>, vector<16x128xf32> -> vector<16x128xf32>
    %c0_3 = arith.constant 0 : index
    %c0_4 = arith.constant 0 : index
    %4 = vector.load %arg3[%c0_3, %c0_4] : memref<1x128xf32, #tpu.memory_space<vmem>>, vector<1x128xf32>
    %5 = vector.broadcast %4 : vector<1x128xf32> to vector<16x128xf32>
    %6 = arith.addf %3, %5 : vector<16x128xf32>
    %7 = vector.extract_strided_slice %6 {offsets = [0, 0], sizes = [16, 64], strides = [1, 1]} : vector<16x128xf32> to vector<16x64xf32>
    %8 = vector.extract_strided_slice %6 {offsets = [0, 64], sizes = [16, 16], strides = [1, 1]} : vector<16x128xf32> to vector<16x16xf32>
    %9 = arith.truncf %8 : vector<16x16xf32> to vector<16x16xbf16>
    %10 = vector.extract_strided_slice %6 {offsets = [0, 80], sizes = [16, 16], strides = [1, 1]} : vector<16x128xf32> to vector<16x16xf32>
    %11 = arith.truncf %10 : vector<16x16xf32> to vector<16x16xbf16>
    %12 = vector.extract_strided_slice %7 {offsets = [0, 0], sizes = [16, 16], strides = [1, 1]} : vector<16x64xf32> to vector<16x16xf32>
    %13 = vector.extract_strided_slice %7 {offsets = [0, 16], sizes = [16, 16], strides = [1, 1]} : vector<16x64xf32> to vector<16x16xf32>
    %14 = vector.extract_strided_slice %7 {offsets = [0, 32], sizes = [16, 16], strides = [1, 1]} : vector<16x64xf32> to vector<16x16xf32>
    %15 = vector.extract_strided_slice %7 {offsets = [0, 48], sizes = [16, 16], strides = [1, 1]} : vector<16x64xf32> to vector<16x16xf32>
    %16 = tpu.concatenate %12, %13, %14, %15 in 0 : vector<16x16xf32>, vector<16x16xf32>, vector<16x16xf32>, vector<16x16xf32> -> vector<64x16xf32>
    %17 = arith.truncf %16 : vector<64x16xf32> to vector<64x16xbf16>
    %cst_5 = arith.constant dense<0.000000e+00> : vector<64x16xf32>
    %18 = tpu.matmul %17, %9, %cst_5 {dimension_numbers = #tpu.dot_dimension_numbers<[1], [1], [0], [0], [0, 0, 1, 0], [], []>} : vector<64x16xbf16>, vector<16x16xbf16>, vector<64x16xf32> -> vector<64x16xf32>
    %c0_6 = arith.constant 0 : index
    %c0_7 = arith.constant 0 : index
    %19 = vector.load %arg6[%c0_6, %c0_7] : memref<64x16xf32, #tpu.memory_space<vmem>>, vector<64x16xf32>
    %20 = arith.addf %18, %19 : vector<64x16xf32>
    %cst_8 = arith.constant dense<0xFF800000> : vector<64xf32>
    %21 = vector.multi_reduction <maximumf>, %20, %cst_8 [1] : vector<64x16xf32> to vector<64xf32>
    %22 = vector.shape_cast %21 : vector<64xf32> to vector<64x1xf32>
    %23 = vector.broadcast %22 : vector<64x1xf32> to vector<64x16xf32>
    %24 = arith.subf %20, %23 : vector<64x16xf32>
    %25 = math.exp %24 : vector<64x16xf32>
    %cst_9 = arith.constant dense<0.000000e+00> : vector<64xf32>
    %26 = vector.multi_reduction <add>, %25, %cst_9 [1] : vector<64x16xf32> to vector<64xf32>
    %27 = vector.shape_cast %26 : vector<64xf32> to vector<64x1xf32>
    %28 = tpu.reciprocal %27 {approx = true} : vector<64x1xf32> -> vector<64x1xf32>
    %29 = vector.broadcast %28 : vector<64x1xf32> to vector<64x16xf32>
    %30 = arith.mulf %25, %29 : vector<64x16xf32>
    %31 = arith.truncf %30 : vector<64x16xf32> to vector<64x16xbf16>
    %cst_10 = arith.constant dense<0.000000e+00> : vector<64x16xf32>
    %32 = tpu.matmul %31, %11, %cst_10 {dimension_numbers = #tpu.dot_dimension_numbers<[1], [0], [0], [1], [0, 0, 1, 1], [], []>} : vector<64x16xbf16>, vector<16x16xbf16>, vector<64x16xf32> -> vector<64x16xf32>
    %33 = vector.shape_cast %32 : vector<64x16xf32> to vector<4x16x16xf32>
    %34 = arith.truncf %33 : vector<4x16x16xf32> to vector<4x16x16xbf16>
    %c0_11 = arith.constant 0 : index
    %c0_12 = arith.constant 0 : index
    %c0_13 = arith.constant 0 : index
    %35 = vector.load %arg4[%c0_11, %c0_12, %c0_13] : memref<4x16x128xbf16, #tpu.memory_space<vmem>>, vector<4x16x128xbf16>
    "tpu.trace_start"() <{level = 10 : i32, message = "hqd,hde->hqe"}> : () -> ()
    %cst_14 = arith.constant dense<0.000000e+00> : vector<4x16x128xf32>
    %36 = tpu.matmul %34, %35, %cst_14 {dimension_numbers = #tpu.dot_dimension_numbers<[2], [1], [1], [2], [0, 0, 0, 1, 1, 2], [0], [0]>} : vector<4x16x16xbf16>, vector<4x16x128xbf16>, vector<4x16x128xf32> -> vector<4x16x128xf32>
    "tpu.trace_stop"() : () -> ()
    %cst_15 = arith.constant dense<0.000000e+00> : vector<16x128xf32>
    %37 = vector.multi_reduction <add>, %36, %cst_15 [0] : vector<4x16x128xf32> to vector<16x128xf32>
    %c0_16 = arith.constant 0 : index
    %c0_17 = arith.constant 0 : index
    %38 = vector.load %arg5[%c0_16, %c0_17] : memref<1x128xf32, #tpu.memory_space<vmem>>, vector<1x128xf32>
    %39 = vector.broadcast %38 : vector<1x128xf32> to vector<16x128xf32>
    %40 = arith.addf %37, %39 : vector<16x128xf32>
    %41 = tpu.iota {dimensions = array<i32: 1>} : vector<16x128xi32>
    %c64_i32 = arith.constant 64 : i32
    %42 = vector.broadcast %c64_i32 : i32 to vector<16x128xi32>
    %43 = arith.cmpi slt, %41, %42 : vector<16x128xi32>
    %44 = arith.select %43, %40, %6 : vector<16x128xi1>, vector<16x128xf32>
    %c0_18 = arith.constant 0 : index
    %c0_19 = arith.constant 0 : index
    %45 = vector.load %arg7[%c0_18, %c0_19] : memref<16x128xf32, #tpu.memory_space<vmem>>, vector<16x128xf32>
    tpu.vector_store %arg7[%c0_18, %c0_19], %44 {strides = array<i32>} : memref<16x128xf32, #tpu.memory_space<vmem>>, vector<16x128xf32>,
    return
  }
  func.func @transform_0(%arg0: i32) -> (i32, i32) {
    %c0_i32 = arith.constant 0 : i32
    %c0_i32_0 = arith.constant 0 : i32
    %c0_i32_1 = arith.constant 0 : i32
    return %c0_i32, %c0_i32_0 : i32, i32
  }
  func.func @transform_1(%arg0: i32) -> (i32, i32) {
    %c0_i32 = arith.constant 0 : i32
    %c0_i32_0 = arith.constant 0 : i32
    %c0_i32_1 = arith.constant 0 : i32
    return %c0_i32, %c0_i32_0 : i32, i32
  }
  func.func @transform_2(%arg0: i32) -> (i32, i32) {
    %c0_i32 = arith.constant 0 : i32
    %c0_i32_0 = arith.constant 0 : i32
    %c0_i32_1 = arith.constant 0 : i32
    return %c0_i32, %c0_i32_0 : i32, i32
  }
  func.func @transform_3(%arg0: i32) -> (i32, i32, i32) {
    %c0_i32 = arith.constant 0 : i32
    %c0_i32_0 = arith.constant 0 : i32
    %c0_i32_1 = arith.constant 0 : i32
    %c0_i32_2 = arith.constant 0 : i32
    return %c0_i32, %c0_i32_0, %c0_i32_1 : i32, i32, i32
  }
  func.func @transform_4(%arg0: i32) -> (i32, i32) {
    %c0_i32 = arith.constant 0 : i32
    %c0_i32_0 = arith.constant 0 : i32
    %c0_i32_1 = arith.constant 0 : i32
    return %c0_i32, %c0_i32_0 : i32, i32
  }
  func.func @transform_5(%arg0: i32) -> (i32, i32) {
    %c0_i32 = arith.constant 0 : i32
    %c0_i32_0 = arith.constant 0 : i32
    %c0_i32_1 = arith.constant 0 : i32
    return %c0_i32, %c0_i32_0 : i32, i32
  }
  func.func @transform_6(%arg0: i32) -> (i32, i32) {
    %c0_i32 = arith.constant 0 : i32
    %c0_i32_0 = arith.constant 0 : i32
    %c0_i32_1 = arith.constant 0 : i32
    return %c0_i32, %c0_i32_0 : i32, i32
  }
}

</mosaic_0001>

<llo_original>
// kernel: tpu_custom_call.1
$region0: #{tpu_custom_call.1}
  #allocation0 [shape = 'u32[]', space=smem, size = 0x4, offset = 0x4, fixed_abs, tag = 'smem constant byte address 0x4 - core index']
  #allocation1 [shape = 'u32[144,128]{1,0:T(1,128)}', space=vmem, size = 0x12000, scoped, tag = 'internal scratch']
  %s0 = inlined_call_operand.vmem [shape: f32[16,64], index: 0, kind: input, shape index: {}]
  %s1 = inlined_call_operand.vmem [shape: bf16[64,128], index: 1, kind: input, shape index: {}]
  %s2 = inlined_call_operand.vmem [shape: f32[1,128], index: 2, kind: input, shape index: {}]
  %s3 = inlined_call_operand.vmem [shape: bf16[4,16,128], index: 3, kind: input, shape index: {}]
  %s4 = inlined_call_operand.vmem [shape: f32[1,128], index: 4, kind: input, shape index: {}]
  %s5 = inlined_call_operand.vmem [shape: f32[64,16], index: 5, kind: input, shape index: {}]
  %s6 = inlined_call_operand.hbm [shape: f32[16,128], index: 6, kind: output, shape index: {}]
  %s7 = sld [smem:[#allocation0]]
  $region34: #{tpu_custom_call.1} parent=0
    _
  %s9 = ssub.s32 1, %s7
  %s10 = scalar_select 0, %s9, %s7
  $region1: #{tpu_custom_call.1} parent=0
    #allocation2 [shape = 'u8[8192]{0}', space=vmem, size = 0x2000, scoped, tag = 'output window, operand 0, single buffered']
    #allocation3 [shape = 's32[1]{0}', space=sflag, size = 0x4, scoped, tag = 'scoped memory for tpu_custom_call.1']
    %11 = vsyncpa [#allocation3], 0
    // Predicated region
    $region2: #{tpu_custom_call.1} parent=1 // pred_check
      _
    $region3: #{tpu_custom_call.1} parent=1 // pred_check_branch
      %13 = sbr.rel (0) target = $region5
    $region4: #{tpu_custom_call.1} parent=1 // pred_region
      _
    $region5: #{tpu_custom_call.1} parent=1 // pred_fallthru
      _
    // Predicated region
    $region6: #{tpu_custom_call.1} parent=1 // pred_check
      _
    $region7: #{tpu_custom_call.1} parent=1 // pred_check_branch
      %15 = sbr.rel (0) target = $region9
    $region8: #{tpu_custom_call.1} parent=1 // pred_region
      _
    $region9: #{tpu_custom_call.1} parent=1 // pred_fallthru
      _
    // Predicated region
    $region10: #{tpu_custom_call.1} parent=1 // pred_check
      _
    $region11: #{tpu_custom_call.1} parent=1 // pred_check_branch
      %17 = sbr.rel (0) target = $region13
    $region12: #{tpu_custom_call.1} parent=1 // pred_region
      _
    $region13: #{tpu_custom_call.1} parent=1 // pred_fallthru
      _
    // Predicated region
    $region14: #{tpu_custom_call.1} parent=1 // pred_check
      _
    $region15: #{tpu_custom_call.1} parent=1 // pred_check_branch
      %19 = sbr.rel (0) target = $region17
    $region16: #{tpu_custom_call.1} parent=1 // pred_region
      _
    $region17: #{tpu_custom_call.1} parent=1 // pred_fallthru
      _
    // Predicated region
    $region18: #{tpu_custom_call.1} parent=1 // pred_check
      _
    $region19: #{tpu_custom_call.1} parent=1 // pred_check_branch
      %21 = sbr.rel (0) target = $region21
    $region20: #{tpu_custom_call.1} parent=1 // pred_region
      _
    $region21: #{tpu_custom_call.1} parent=1 // pred_fallthru
      _
    // Predicated region
    $region22: #{tpu_custom_call.1} parent=1 // pred_check
      _
    $region23: #{tpu_custom_call.1} parent=1 // pred_check_branch
      %23 = sbr.rel (0) target = $region25
    $region24: #{tpu_custom_call.1} parent=1 // pred_region
      _
    $region25: #{tpu_custom_call.1} parent=1 // pred_fallthru
      _
    %v25 = vld [vmem:[%s0] sm:$0xff]
    %v26 = vld [vmem:[%s0 + $0x8] sm:$0xff]
    %v27 = vpack.c.bf16 %v26, %v25
    %v28 = vld [vmem:[%s1] sm:$0xf]
    %v29 = vld [vmem:[%s1 + $0x4] sm:$0xf]
    %v30 = vld [vmem:[%s1 + $0x8] sm:$0xf]
    %v31 = vld [vmem:[%s1 + $0xc] sm:$0xf]
    %v32 = vld [vmem:[%s1 + $0x10] sm:$0xf]
    %v33 = vld [vmem:[%s1 + $0x14] sm:$0xf]
    %v34 = vld [vmem:[%s1 + $0x18] sm:$0xf]
    %v35 = vld [vmem:[%s1 + $0x1c] sm:$0xf]
    %v36 = vld [vmem:[%s2] sm:$0x1]
    %v38 = vlaneseq
    %v39 = vshrl.u32 %v38, 7
    %v40 = vsub.s32 0, %v39
    %v41 = vrot.slane %v36, %v40
    %v51 = vunpack.c.l.b16 %v28
    %v52 = vunpack.c.l.b16 %v29
    %v53 = vunpack.c.l.b16 %v30
    %v54 = vunpack.c.l.b16 %v31
    %v55 = vunpack.c.l.b16 %v32
    %v56 = vunpack.c.l.b16 %v33
    %v57 = vunpack.c.l.b16 %v34
    %v58 = vunpack.c.l.b16 %v35
    %v59 = vpack.c.b16 %v52, %v51
    %v60 = vpack.c.b16 %v54, %v53
    %v61 = vpack.c.b16 %v56, %v55
    %v62 = vpack.c.b16 %v58, %v57
    %vm67 = vcmask 523264
    %v69 = vsel %vm67, %v27, 0
    %71 = vmatprep.subr.bf16.mxu0 0
    %72 = vmatpush1.bf16.msra.mxu0 0
    %73 = vmatprep.subr.bf16.mxu0 0
    %74 = vmatpush1.bf16.msra.mxu0 0
    %75 = vmatprep.subr.bf16.mxu0 0
    %76 = vmatpush1.bf16.msra.mxu0 0
    %77 = vmatprep.subr.bf16.mxu0 0
    %78 = vmatpush1.bf16.msra.mxu0 0
    %79 = vmatprep.subr.bf16.mxu0 0
    %80 = vmatpush1.bf16.msra.mxu0 %v62
    %81 = vmatprep.subr.bf16.mxu0 0
    %82 = vmatpush1.bf16.msra.mxu0 %v61
    %83 = vmatprep.subr.bf16.mxu0 0
    %84 = vmatpush1.bf16.msra.mxu0 %v60
    %85 = vmatprep.subr.bf16.mxu0 0
    %86 = vmatpush1.bf16.msra.mxu0 %v59
    %87 = vmatprep.subr.bf16.mxu0 0
    %88 = vmatpush2.bf16.msra.mxu0 0
    %89 = vmatprep.subr.bf16.mxu0 0
    %90 = vmatpush2.bf16.msra.mxu0 0
    %91 = vmatprep.subr.bf16.mxu0 0
    %92 = vmatpush2.bf16.msra.mxu0 0
    %93 = vmatprep.subr.bf16.mxu0 0
    %94 = vmatpush2.bf16.msra.mxu0 0
    %95 = vmatprep.subr.bf16.mxu0 0
    %96 = vmatpush2.bf16.msra.mxu0 0
    %97 = vmatprep.subr.bf16.mxu0 0
    %98 = vmatpush2.bf16.msra.mxu0 0
    %99 = vmatprep.subr.bf16.mxu0 0
    %100 = vmatpush2.bf16.msra.mxu0 0
    %101 = vmatprep.subr.bf16.mxu0 0
    %102 = vmatpush2.bf16.msra.mxu0 0
    %103 = vmatprep.mubr.bf16.mxu0 0
    %104 = vmatmul.mubr.bf16.gmra.mxu0 %v69
    %v105 = vpop.f32.mrf.mxu0
    %v106 = vadd.f32 %v41, %v105
    %v107 = vpop.f32.mrf.mxu0
    %v108 = vpop.f32.mrf.mxu0
    %v109 = vadd.f32 %v41, %v108
    %v110 = vpop.f32.mrf.mxu0
    %111 = vdwg.mxu0
    %v112 = vpack.c.bf16 %v109, %v106
    %115 = vrot.lane.b32.xlu0 %v106, 112
    %v116 = vpop.permute.xlu0 %115
    %117 = vrot.lane.b32.xlu0 %v109, 112
    %v118 = vpop.permute.xlu0 %117
    %121 = vrot.lane.b32.xlu0 %v106, 96
    %v122 = vpop.permute.xlu0 %121
    %123 = vrot.lane.b32.xlu0 %v109, 96
    %v124 = vpop.permute.xlu0 %123
    %127 = vrot.lane.b32.xlu0 %v106, 80
    %v128 = vpop.permute.xlu0 %127
    %129 = vrot.lane.b32.xlu0 %v109, 80
    %v130 = vpop.permute.xlu0 %129
    %v133 = vpack.c.bf16 %v118, %v116
    %v134 = vpack.c.bf16 %v124, %v122
    %v135 = vpack.c.bf16 %v130, %v128
    %v136 = vld [vmem:[%s5] sm:$0xff]
    %v137 = vld [vmem:[%s5 + $0x8] sm:$0xff]
    %v138 = vld [vmem:[%s5 + $0x10] sm:$0xff]
    %v139 = vld [vmem:[%s5 + $0x18] sm:$0xff]
    %v140 = vld [vmem:[%s5 + $0x20] sm:$0xff]
    %v141 = vld [vmem:[%s5 + $0x28] sm:$0xff]
    %v142 = vld [vmem:[%s5 + $0x30] sm:$0xff]
    %v143 = vld [vmem:[%s5 + $0x38] sm:$0xff]
    %145 = vrot.lane.b32.xlu0 %v112, 64
    %v146 = vpop.permute.xlu0 %145
    %vm147 = vcmask 130048
    %v149 = vsel %vm147, %v112, 0
    %v152 = vsel %vm147, %v133, 0
    %v155 = vsel %vm147, %v134, 0
    %v158 = vsel %vm147, %v135, 0
    %v161 = vsel %vm147, %v146, 0
    %163 = vmatprep.subr.bf16.mxu0 0
    %164 = vmatpush1.bf16.xpose.msra.mxu0 0
    %165 = vmatprep.subr.bf16.mxu0 0
    %166 = vmatpush1.bf16.xpose.msra.mxu0 0
    %167 = vmatprep.subr.bf16.mxu0 0
    %168 = vmatpush1.bf16.xpose.msra.mxu0 0
    %169 = vmatprep.subr.bf16.mxu0 0
    %170 = vmatpush1.bf16.xpose.msra.mxu0 0
    %171 = vmatprep.subr.bf16.mxu0 0
    %172 = vmatpush1.bf16.xpose.msra.mxu0 0
    %173 = vmatprep.subr.bf16.mxu0 0
    %174 = vmatpush1.bf16.xpose.msra.mxu0 0
    %175 = vmatprep.subr.bf16.mxu0 0
    %176 = vmatpush1.bf16.xpose.msra.mxu0 0
    %177 = vmatprep.subr.bf16.mxu0 0
    %178 = vmatpush1.bf16.xpose.msra.mxu0 %v161
    %179 = vmatprep.subr.bf16.mxu0 0
    %180 = vmatpush2.bf16.xpose.msra.mxu0 0
    %181 = vmatprep.subr.bf16.mxu0 0
    %182 = vmatpush2.bf16.xpose.msra.mxu0 0
    %183 = vmatprep.subr.bf16.mxu0 0
    %184 = vmatpush2.bf16.xpose.msra.mxu0 0
    %185 = vmatprep.subr.bf16.mxu0 0
    %186 = vmatpush2.bf16.xpose.msra.mxu0 0
    %187 = vmatprep.subr.bf16.mxu0 0
    %188 = vmatpush2.bf16.xpose.msra.mxu0 0
    %189 = vmatprep.subr.bf16.mxu0 0
    %190 = vmatpush2.bf16.xpose.msra.mxu0 0
    %191 = vmatprep.subr.bf16.mxu0 0
    %192 = vmatpush2.bf16.xpose.msra.mxu0 0
    %193 = vmatprep.subr.bf16.mxu0 0
    %194 = vmatpush2.bf16.xpose.msra.mxu0 0
    %195 = vmatprep.mubr.bf16.mxu0 0
    %196 = vmatmul.mubr.bf16.gmra.mxu0 %v149
    %v197 = vpop.f32.mrf.mxu0
    %v198 = vadd.f32 %v136, %v197
    %v199 = vpop.f32.mrf.mxu0
    %v200 = vpop.f32.mrf.mxu0
    %v201 = vadd.f32 %v137, %v200
    %v202 = vpop.f32.mrf.mxu0
    %203 = vmatprep.mubr.bf16.mxu0 0
    %204 = vmatmul.mubr.bf16.gmra.mxu0 %v152
    %v205 = vpop.f32.mrf.mxu0
    %v206 = vadd.f32 %v138, %v205
    %v207 = vpop.f32.mrf.mxu0
    %v208 = vpop.f32.mrf.mxu0
    %v209 = vadd.f32 %v139, %v208
    %v210 = vpop.f32.mrf.mxu0
    %211 = vmatprep.mubr.bf16.mxu0 0
    %212 = vmatmul.mubr.bf16.gmra.mxu0 %v155
    %v213 = vpop.f32.mrf.mxu0
    %v214 = vadd.f32 %v140, %v213
    %v215 = vpop.f32.mrf.mxu0
    %v216 = vpop.f32.mrf.mxu0
    %v217 = vadd.f32 %v141, %v216
    %v218 = vpop.f32.mrf.mxu0
    %219 = vmatprep.mubr.bf16.mxu0 0
    %220 = vmatmul.mubr.bf16.gmra.mxu0 %v158
    %v221 = vpop.f32.mrf.mxu0
    %v222 = vadd.f32 %v142, %v221
    %v223 = vpop.f32.mrf.mxu0
    %v224 = vpop.f32.mrf.mxu0
    %v225 = vadd.f32 %v143, %v224
    %v226 = vpop.f32.mrf.mxu0
    %227 = vdwg.mxu0
    %v228 = vsel %vm147, %v198, -inf
    %229 = vmax.xlane.f32.xlu0 %v228
    %v230 = vpop.xlane.xlu0 %229
    %v231 = vsel %vm147, %v201, -inf
    %232 = vmax.xlane.f32.xlu0 %v231
    %v233 = vpop.xlane.xlu0 %232
    %v234 = vsel %vm147, %v206, -inf
    %235 = vmax.xlane.f32.xlu0 %v234
    %v236 = vpop.xlane.xlu0 %235
    %v237 = vsel %vm147, %v209, -inf
    %238 = vmax.xlane.f32.xlu0 %v237
    %v239 = vpop.xlane.xlu0 %238
    %v240 = vsel %vm147, %v214, -inf
    %241 = vmax.xlane.f32.xlu0 %v240
    %v242 = vpop.xlane.xlu0 %241
    %v243 = vsel %vm147, %v217, -inf
    %244 = vmax.xlane.f32.xlu0 %v243
    %v245 = vpop.xlane.xlu0 %244
    %v246 = vsel %vm147, %v222, -inf
    %247 = vmax.xlane.f32.xlu0 %v246
    %v248 = vpop.xlane.xlu0 %247
    %v249 = vsel %vm147, %v225, -inf
    %250 = vmax.xlane.f32.xlu0 %v249
    %v251 = vpop.xlane.xlu0 %250
    %v252 = vsub.f32 %v198, %v230
    %v253 = vsub.f32 %v201, %v233
    %v254 = vsub.f32 %v206, %v236
    %v255 = vsub.f32 %v209, %v239
    %v256 = vsub.f32 %v214, %v242
    %v257 = vsub.f32 %v217, %v245
    %v258 = vsub.f32 %v222, %v248
    %v259 = vsub.f32 %v225, %v251
    %v260 = vmul.f32 %v252, 1.442695
    %v261 = vpow.pop %v260
    %v262 = vmul.f32 %v253, 1.442695
    %v263 = vpow.pop %v262
    %v264 = vmul.f32 %v254, 1.442695
    %v265 = vpow.pop %v264
    %v266 = vmul.f32 %v255, 1.442695
    %v267 = vpow.pop %v266
    %v268 = vmul.f32 %v256, 1.442695
    %v269 = vpow.pop %v268
    %v270 = vmul.f32 %v257, 1.442695
    %v271 = vpow.pop %v270
    %v272 = vmul.f32 %v258, 1.442695
    %v273 = vpow.pop %v272
    %v274 = vmul.f32 %v259, 1.442695
    %v275 = vpow.pop %v274
    %v276 = vsel %vm147, %v261, 0.0
    %277 = vadd.xlane.f32.xlu0 %v276
    %v278 = vpop.xlane.xlu0 %277
    %v279 = vsel %vm147, %v263, 0.0
    %280 = vadd.xlane.f32.xlu0 %v279
    %v281 = vpop.xlane.xlu0 %280
    %v282 = vsel %vm147, %v265, 0.0
    %283 = vadd.xlane.f32.xlu0 %v282
    %v284 = vpop.xlane.xlu0 %283
    %v285 = vsel %vm147, %v267, 0.0
    %286 = vadd.xlane.f32.xlu0 %v285
    %v287 = vpop.xlane.xlu0 %286
    %v288 = vsel %vm147, %v269, 0.0
    %289 = vadd.xlane.f32.xlu0 %v288
    %v290 = vpop.xlane.xlu0 %289
    %v291 = vsel %vm147, %v271, 0.0
    %292 = vadd.xlane.f32.xlu0 %v291
    %v293 = vpop.xlane.xlu0 %292
    %v294 = vsel %vm147, %v273, 0.0
    %295 = vadd.xlane.f32.xlu0 %v294
    %v296 = vpop.xlane.xlu0 %295
    %v297 = vsel %vm147, %v275, 0.0
    %298 = vadd.xlane.f32.xlu0 %v297
    %v299 = vpop.xlane.xlu0 %298
    %v300 = vrcp.pop %v278
    %v301 = vrcp.pop %v281
    %v302 = vrcp.pop %v284
    %v303 = vrcp.pop %v287
    %v304 = vrcp.pop %v290
    %v305 = vrcp.pop %v293
    %v306 = vrcp.pop %v296
    %v307 = vrcp.pop %v299
    %v308 = vmul.f32 %v261, %v300
    %v309 = vmul.f32 %v263, %v301
    %v310 = vmul.f32 %v265, %v302
    %v311 = vmul.f32 %v267, %v303
    %v312 = vmul.f32 %v269, %v304
    %v313 = vmul.f32 %v271, %v305
    %v314 = vmul.f32 %v273, %v306
    %v315 = vmul.f32 %v275, %v307
    %v316 = vpack.c.bf16 %v309, %v308
    %v317 = vpack.c.bf16 %v311, %v310
    %v318 = vpack.c.bf16 %v313, %v312
    %v319 = vpack.c.bf16 %v315, %v314
    %320 = vrot.lane.b32.xlu0 %v112, 48
    %v321 = vpop.permute.xlu0 %320
    %v324 = vsel %vm147, %v316, 0
    %v327 = vsel %vm147, %v317, 0
    %v330 = vsel %vm147, %v318, 0
    %v333 = vsel %vm147, %v319, 0
    %335 = vmatprep.subr.bf16.mxu0 0
    %336 = vmatpush1.bf16.msra.mxu0 0
    %337 = vmatprep.subr.bf16.mxu0 0
    %338 = vmatpush1.bf16.msra.mxu0 0
    %339 = vmatprep.subr.bf16.mxu0 0
    %340 = vmatpush1.bf16.msra.mxu0 0
    %341 = vmatprep.subr.bf16.mxu0 0
    %342 = vmatpush1.bf16.msra.mxu0 0
    %343 = vmatprep.subr.bf16.mxu0 0
    %344 = vmatpush1.bf16.msra.mxu0 0
    %345 = vmatprep.subr.bf16.mxu0 0
    %346 = vmatpush1.bf16.msra.mxu0 0
    %347 = vmatprep.subr.bf16.mxu0 0
    %348 = vmatpush1.bf16.msra.mxu0 0
    %349 = vmatprep.subr.bf16.mxu0 0
    %350 = vmatpush1.bf16.msra.mxu0 %v321
    %351 = vmatprep.subr.bf16.mxu0 0
    %352 = vmatpush2.bf16.msra.mxu0 0
    %353 = vmatprep.subr.bf16.mxu0 0
    %354 = vmatpush2.bf16.msra.mxu0 0
    %355 = vmatprep.subr.bf16.mxu0 0
    %356 = vmatpush2.bf16.msra.mxu0 0
    %357 = vmatprep.subr.bf16.mxu0 0
    %358 = vmatpush2.bf16.msra.mxu0 0
    %359 = vmatprep.subr.bf16.mxu0 0
    %360 = vmatpush2.bf16.msra.mxu0 0
    %361 = vmatprep.subr.bf16.mxu0 0
    %362 = vmatpush2.bf16.msra.mxu0 0
    %363 = vmatprep.subr.bf16.mxu0 0
    %364 = vmatpush2.bf16.msra.mxu0 0
    %365 = vmatprep.subr.bf16.mxu0 0
    %366 = vmatpush2.bf16.msra.mxu0 0
    %367 = vmatprep.mubr.bf16.mxu0 0
    %368 = vmatmul.mubr.bf16.gmra.mxu0 %v324
    %v369 = vpop.f32.mrf.mxu0
    %v370 = vadd.f32 0.0, %v369
    %v371 = vpop.f32.mrf.mxu0
    %v372 = vpop.f32.mrf.mxu0
    %v373 = vadd.f32 0.0, %v372
    %v374 = vpop.f32.mrf.mxu0
    %375 = vmatprep.mubr.bf16.mxu0 0
    %376 = vmatmul.mubr.bf16.gmra.mxu0 %v327
    %v377 = vpop.f32.mrf.mxu0
    %v378 = vadd.f32 0.0, %v377
    %v379 = vpop.f32.mrf.mxu0
    %v380 = vpop.f32.mrf.mxu0
    %v381 = vadd.f32 0.0, %v380
    %v382 = vpop.f32.mrf.mxu0
    %383 = vmatprep.mubr.bf16.mxu0 0
    %384 = vmatmul.mubr.bf16.gmra.mxu0 %v330
    %v385 = vpop.f32.mrf.mxu0
    %v386 = vadd.f32 0.0, %v385
    %v387 = vpop.f32.mrf.mxu0
    %v388 = vpop.f32.mrf.mxu0
    %v389 = vadd.f32 0.0, %v388
    %v390 = vpop.f32.mrf.mxu0
    %391 = vmatprep.mubr.bf16.mxu0 0
    %392 = vmatmul.mubr.bf16.gmra.mxu0 %v333
    %v393 = vpop.f32.mrf.mxu0
    %v394 = vadd.f32 0.0, %v393
    %v395 = vpop.f32.mrf.mxu0
    %v396 = vpop.f32.mrf.mxu0
    %v397 = vadd.f32 0.0, %v396
    %v398 = vpop.f32.mrf.mxu0
    %399 = vdwg.mxu0
    %v400 = vpack.c.bf16 %v373, %v370
    %v401 = vpack.c.bf16 %v381, %v378
    %v402 = vpack.c.bf16 %v389, %v386
    %v403 = vpack.c.bf16 %v397, %v394
    %v404 = vld [vmem:[%s3] sm:$0xf]
    %v405 = vld [vmem:[%s3 + $0x4] sm:$0xf]
    %v406 = vld [vmem:[%s3 + $0x8] sm:$0xf]
    %v407 = vld [vmem:[%s3 + $0xc] sm:$0xf]
    %v408 = vld [vmem:[%s3 + $0x10] sm:$0xf]
    %v409 = vld [vmem:[%s3 + $0x14] sm:$0xf]
    %v410 = vld [vmem:[%s3 + $0x18] sm:$0xf]
    %v411 = vld [vmem:[%s3 + $0x1c] sm:$0xf]
    %v414 = vunpack.c.l.b16 %v404
    %v415 = vunpack.c.l.b16 %v405
    %v416 = vpack.c.b16 %v415, %v414
    %v419 = vsel %vm147, %v400, 0
    %421 = vmatprep.subr.bf16.mxu0 0
    %422 = vmatpush1.bf16.msra.mxu0 0
    %423 = vmatprep.subr.bf16.mxu0 0
    %424 = vmatpush1.bf16.msra.mxu0 0
    %425 = vmatprep.subr.bf16.mxu0 0
    %426 = vmatpush1.bf16.msra.mxu0 0
    %427 = vmatprep.subr.bf16.mxu0 0
    %428 = vmatpush1.bf16.msra.mxu0 0
    %429 = vmatprep.subr.bf16.mxu0 0
    %430 = vmatpush1.bf16.msra.mxu0 0
    %431 = vmatprep.subr.bf16.mxu0 0
    %432 = vmatpush1.bf16.msra.mxu0 0
    %433 = vmatprep.subr.bf16.mxu0 0
    %434 = vmatpush1.bf16.msra.mxu0 0
    %435 = vmatprep.subr.bf16.mxu0 0
    %436 = vmatpush1.bf16.msra.mxu0 %v416
    %437 = vmatprep.subr.bf16.mxu0 0
    %438 = vmatpush2.bf16.msra.mxu0 0
    %439 = vmatprep.subr.bf16.mxu0 0
    %440 = vmatpush2.bf16.msra.mxu0 0
    %441 = vmatprep.subr.bf16.mxu0 0
    %442 = vmatpush2.bf16.msra.mxu0 0
    %443 = vmatprep.subr.bf16.mxu0 0
    %444 = vmatpush2.bf16.msra.mxu0 0
    %445 = vmatprep.subr.bf16.mxu0 0
    %446 = vmatpush2.bf16.msra.mxu0 0
    %447 = vmatprep.subr.bf16.mxu0 0
    %448 = vmatpush2.bf16.msra.mxu0 0
    %449 = vmatprep.subr.bf16.mxu0 0
    %450 = vmatpush2.bf16.msra.mxu0 0
    %451 = vmatprep.subr.bf16.mxu0 0
    %452 = vmatpush2.bf16.msra.mxu0 0
    %453 = vmatprep.mubr.bf16.mxu0 0
    %454 = vmatmul.mubr.bf16.gmra.mxu0 %v419
    %v455 = vpop.f32.mrf.mxu0
    %v456 = vadd.f32 0.0, %v455
    %v457 = vpop.f32.mrf.mxu0
    %v458 = vpop.f32.mrf.mxu0
    %v459 = vadd.f32 0.0, %v458
    %v460 = vpop.f32.mrf.mxu0
    %461 = vdwg.mxu0
    %v464 = vunpack.c.l.b16 %v406
    %v465 = vunpack.c.l.b16 %v407
    %v466 = vpack.c.b16 %v465, %v464
    %v469 = vsel %vm147, %v401, 0
    %471 = vmatprep.subr.bf16.mxu0 0
    %472 = vmatpush1.bf16.msra.mxu0 0
    %473 = vmatprep.subr.bf16.mxu0 0
    %474 = vmatpush1.bf16.msra.mxu0 0
    %475 = vmatprep.subr.bf16.mxu0 0
    %476 = vmatpush1.bf16.msra.mxu0 0
    %477 = vmatprep.subr.bf16.mxu0 0
    %478 = vmatpush1.bf16.msra.mxu0 0
    %479 = vmatprep.subr.bf16.mxu0 0
    %480 = vmatpush1.bf16.msra.mxu0 0
    %481 = vmatprep.subr.bf16.mxu0 0
    %482 = vmatpush1.bf16.msra.mxu0 0
    %483 = vmatprep.subr.bf16.mxu0 0
    %484 = vmatpush1.bf16.msra.mxu0 0
    %485 = vmatprep.subr.bf16.mxu0 0
    %486 = vmatpush1.bf16.msra.mxu0 %v466
    %487 = vmatprep.subr.bf16.mxu0 0
    %488 = vmatpush2.bf16.msra.mxu0 0
    %489 = vmatprep.subr.bf16.mxu0 0
    %490 = vmatpush2.bf16.msra.mxu0 0
    %491 = vmatprep.subr.bf16.mxu0 0
    %492 = vmatpush2.bf16.msra.mxu0 0
    %493 = vmatprep.subr.bf16.mxu0 0
    %494 = vmatpush2.bf16.msra.mxu0 0
    %495 = vmatprep.subr.bf16.mxu0 0
    %496 = vmatpush2.bf16.msra.mxu0 0
    %497 = vmatprep.subr.bf16.mxu0 0
    %498 = vmatpush2.bf16.msra.mxu0 0
    %499 = vmatprep.subr.bf16.mxu0 0
    %500 = vmatpush2.bf16.msra.mxu0 0
    %501 = vmatprep.subr.bf16.mxu0 0
    %502 = vmatpush2.bf16.msra.mxu0 0
    %503 = vmatprep.mubr.bf16.mxu0 0
    %504 = vmatmul.mubr.bf16.gmra.mxu0 %v469
    %v505 = vpop.f32.mrf.mxu0
    %v506 = vadd.f32 0.0, %v505
    %v507 = vpop.f32.mrf.mxu0
    %v508 = vpop.f32.mrf.mxu0
    %v509 = vadd.f32 0.0, %v508
    %v510 = vpop.f32.mrf.mxu0
    %511 = vdwg.mxu0
    %v514 = vunpack.c.l.b16 %v408
    %v515 = vunpack.c.l.b16 %v409
    %v516 = vpack.c.b16 %v515, %v514
    %v519 = vsel %vm147, %v402, 0
    %521 = vmatprep.subr.bf16.mxu0 0
    %522 = vmatpush1.bf16.msra.mxu0 0
    %523 = vmatprep.subr.bf16.mxu0 0
    %524 = vmatpush1.bf16.msra.mxu0 0
    %525 = vmatprep.subr.bf16.mxu0 0
    %526 = vmatpush1.bf16.msra.mxu0 0
    %527 = vmatprep.subr.bf16.mxu0 0
    %528 = vmatpush1.bf16.msra.mxu0 0
    %529 = vmatprep.subr.bf16.mxu0 0
    %530 = vmatpush1.bf16.msra.mxu0 0
    %531 = vmatprep.subr.bf16.mxu0 0
    %532 = vmatpush1.bf16.msra.mxu0 0
    %533 = vmatprep.subr.bf16.mxu0 0
    %534 = vmatpush1.bf16.msra.mxu0 0
    %535 = vmatprep.subr.bf16.mxu0 0
    %536 = vmatpush1.bf16.msra.mxu0 %v516
    %537 = vmatprep.subr.bf16.mxu0 0
    %538 = vmatpush2.bf16.msra.mxu0 0
    %539 = vmatprep.subr.bf16.mxu0 0
    %540 = vmatpush2.bf16.msra.mxu0 0
    %541 = vmatprep.subr.bf16.mxu0 0
    %542 = vmatpush2.bf16.msra.mxu0 0
    %543 = vmatprep.subr.bf16.mxu0 0
    %544 = vmatpush2.bf16.msra.mxu0 0
    %545 = vmatprep.subr.bf16.mxu0 0
    %546 = vmatpush2.bf16.msra.mxu0 0
    %547 = vmatprep.subr.bf16.mxu0 0
    %548 = vmatpush2.bf16.msra.mxu0 0
    %549 = vmatprep.subr.bf16.mxu0 0
    %550 = vmatpush2.bf16.msra.mxu0 0
    %551 = vmatprep.subr.bf16.mxu0 0
    %552 = vmatpush2.bf16.msra.mxu0 0
    %553 = vmatprep.mubr.bf16.mxu0 0
    %554 = vmatmul.mubr.bf16.gmra.mxu0 %v519
    %v555 = vpop.f32.mrf.mxu0
    %v556 = vadd.f32 0.0, %v555
    %v557 = vpop.f32.mrf.mxu0
    %v558 = vpop.f32.mrf.mxu0
    %v559 = vadd.f32 0.0, %v558
    %v560 = vpop.f32.mrf.mxu0
    %561 = vdwg.mxu0
    %v564 = vunpack.c.l.b16 %v410
    %v565 = vunpack.c.l.b16 %v411
    %v566 = vpack.c.b16 %v565, %v564
    %v569 = vsel %vm147, %v403, 0
    %571 = vmatprep.subr.bf16.mxu0 0
    %572 = vmatpush1.bf16.msra.mxu0 0
    %573 = vmatprep.subr.bf16.mxu0 0
    %574 = vmatpush1.bf16.msra.mxu0 0
    %575 = vmatprep.subr.bf16.mxu0 0
    %576 = vmatpush1.bf16.msra.mxu0 0
    %577 = vmatprep.subr.bf16.mxu0 0
    %578 = vmatpush1.bf16.msra.mxu0 0
    %579 = vmatprep.subr.bf16.mxu0 0
    %580 = vmatpush1.bf16.msra.mxu0 0
    %581 = vmatprep.subr.bf16.mxu0 0
    %582 = vmatpush1.bf16.msra.mxu0 0
    %583 = vmatprep.subr.bf16.mxu0 0
    %584 = vmatpush1.bf16.msra.mxu0 0
    %585 = vmatprep.subr.bf16.mxu0 0
    %586 = vmatpush1.bf16.msra.mxu0 %v566
    %587 = vmatprep.subr.bf16.mxu0 0
    %588 = vmatpush2.bf16.msra.mxu0 0
    %589 = vmatprep.subr.bf16.mxu0 0
    %590 = vmatpush2.bf16.msra.mxu0 0
    %591 = vmatprep.subr.bf16.mxu0 0
    %592 = vmatpush2.bf16.msra.mxu0 0
    %593 = vmatprep.subr.bf16.mxu0 0
    %594 = vmatpush2.bf16.msra.mxu0 0
    %595 = vmatprep.subr.bf16.mxu0 0
    %596 = vmatpush2.bf16.msra.mxu0 0
    %597 = vmatprep.subr.bf16.mxu0 0
    %598 = vmatpush2.bf16.msra.mxu0 0
    %599 = vmatprep.subr.bf16.mxu0 0
    %600 = vmatpush2.bf16.msra.mxu0 0
    %601 = vmatprep.subr.bf16.mxu0 0
    %602 = vmatpush2.bf16.msra.mxu0 0
    %603 = vmatprep.mubr.bf16.mxu0 0
    %604 = vmatmul.mubr.bf16.gmra.mxu0 %v569
    %v605 = vpop.f32.mrf.mxu0
    %v606 = vadd.f32 0.0, %v605
    %v607 = vpop.f32.mrf.mxu0
    %v608 = vpop.f32.mrf.mxu0
    %v609 = vadd.f32 0.0, %v608
    %v610 = vpop.f32.mrf.mxu0
    %611 = vdwg.mxu0
    %v612 = vadd.f32 %v456, %v506
    %v613 = vadd.f32 %v612, %v556
    %v614 = vadd.f32 %v613, %v606
    %v615 = vadd.f32 %v459, %v509
    %v616 = vadd.f32 %v615, %v559
    %v617 = vadd.f32 %v616, %v609
    %v618 = vld [vmem:[%s4] sm:$0x1]
    %v620 = vlaneseq
    %v621 = vshrl.u32 %v620, 7
    %v622 = vsub.s32 0, %v621
    %v623 = vrot.slane %v618, %v622
    %v625 = vadd.f32 %v614, %v623
    %v626 = vadd.f32 %v617, %v623
    %v627 = vlaneseq
    %v628 = vand.u32 %v627, 127
    %vm629 = vcmp.lt.s32.totalorder %v628, 64
    %v630 = vsel %vm629, %v625, %v106
    %v631 = vsel %vm629, %v626, %v109
    %632 = vst [vmem:[#allocation2] sm:$0xff] %v630
    %633 = vst [vmem:[#allocation2 + $0x8] sm:$0xff] %v631
    // Predicated region
    $region26: #{tpu_custom_call.1} parent=1 // pred_check
      _
    $region27: #{tpu_custom_call.1} parent=1 // pred_check_branch
      %635 = sbr.rel (0) target = $region29
    $region28: #{tpu_custom_call.1} parent=1 // pred_region
      %s637 = ssub.s32 256, 256
      %638 = vsyncadd [#allocation3], %s637
      %s639 = sshll.u32 [#allocation2], 4
      %s640 = int_to_ptr.vmem [resolvable:$true] %s639
      %645 = dma.vmem_to_hbm [thread:$0]  %s640, 256, %s6, [#allocation3], 128, 128, 8
    $region29: #{tpu_custom_call.1} parent=1 // pred_fallthru
      _
    // Predicated region
    $region30: #{tpu_custom_call.1} parent=1 // pred_check
      _
    $region31: #{tpu_custom_call.1} parent=1 // pred_check_branch
      %647 = sbr.rel (0) target = $region33
    $region32: #{tpu_custom_call.1} parent=1 // pred_region
      %648 = dma.done [#allocation3], 256
    $region33: #{tpu_custom_call.1} parent=1 // pred_fallthru
      _
    %649 = vsyncpa [#allocation3], 1

</llo_original>
